<compile_context>
chip_gen: v6e
topology: v6e:2x2x1
jax: 0.10.0
libtpu: 0.0.40
codegen_flags: <defaults>
</compile_context>

<pallas_src>
import functools

import jax
import jax.numpy as jnp
from jax.experimental import pallas as pl
from jax.experimental.pallas import tpu as pltpu


def _round_up(x: int, m: int) -> int:
    return ((x + m - 1) // m) * m


def mlp_kernel(x_ref,
               w1_ref, b1_ref,
               w2_ref, b2_ref,
               w3_ref, b3_ref,
               w4_ref, b4_ref,
               o_ref, *, act_dtype):
    """One batch tile of the 4-layer MLP. Weights are VMEM-resident blocks.

    Matmul operands are in the weight dtype (bf16 or f32); accumulation is
    always f32 (preferred_element_type); biases are f32; tanh runs in
    `act_dtype` (bf16 on v6e/v7x, f32 on v5e / f32 path).
    """
    x = x_ref[...]  # already in compute dtype

    a1 = jnp.dot(x, w1_ref[...], preferred_element_type=jnp.float32) + b1_ref[...]
    h1 = jnp.tanh(a1.astype(act_dtype)).astype(w2_ref.dtype)

    a2 = jnp.dot(h1, w2_ref[...], preferred_element_type=jnp.float32) + b2_ref[...]
    h2 = jnp.tanh(a2.astype(act_dtype)).astype(w3_ref.dtype)

    a3 = jnp.dot(h2, w3_ref[...], preferred_element_type=jnp.float32) + b3_ref[...]
    h3 = jnp.tanh(a3.astype(act_dtype)).astype(w4_ref.dtype)

    out = jnp.dot(h3, w4_ref[...], preferred_element_type=jnp.float32) + b4_ref[...]
    o_ref[...] = out.astype(o_ref.dtype)


def default_act_dtype(compute_dtype):
    """bf16 activations only when compute dtype is bf16 and VPU/EUP support it."""
    if jnp.dtype(compute_dtype) != jnp.dtype(jnp.bfloat16):
        return jnp.float32
    try:
        kind = jax.devices()[0].device_kind.lower()
    except Exception:  # pragma: no cover - conservative fallback
        kind = ""
    # v5e has no bf16 VPU/EUP; keep activations in f32 there.
    if ("v5e" in kind) or ("v5 lite" in kind) or ("v5lite" in kind):
        return jnp.float32
    return jnp.bfloat16


def prepare_params(params, compute_dtype=jnp.bfloat16):
    """One-time prep (out of the hot path): pad final layer to 8 output lanes,
    cast weights to compute dtype, keep biases f32 for f32 accumulation."""
    (w1, b1), (w2, b2), (w3, b3), (w4, b4) = params
    out_dim = w4.shape[1]
    out_pad = max(_round_up(out_dim, 8), 8)
    if out_pad != out_dim:
        w4 = jnp.zeros((w4.shape[0], out_pad), w4.dtype).at[:, :out_dim].set(w4)
        b4 = jnp.zeros((1, out_pad), b4.dtype).at[:, :out_dim].set(
            b4.reshape(1, -1))
    return tuple(
        (w.astype(compute_dtype), b.reshape(1, -1).astype(jnp.float32))
        for (w, b) in ((w1, b1), (w2, b2), (w3, b3), (w4, b4))
    )


def network_forward(x, prepared_params, out_dim, *, block_rows=4096,
                    act_dtype=None):
    """Forward pass.

    prepared_params = prepare_params(((w1,b1),...,(w4,b4))); w_i: [in,out]
    (weights transposed vs. PyTorch's nn.Linear [out,in]).
    Returns f32 [batch, out_dim].
    """
    compute_dtype = prepared_params[0][0].dtype
    if act_dtype is None:
        act_dtype = jnp.float32
    batch, in_dim = x.shape
    out_pad = prepared_params[-1][0].shape[1]

    # --- Batch tiling ---------------------------------------------------
    # Align rows to 16 for bf16 sublane packing (8 suffices for f32); size
    # tiles to the batch with >= 2 grid steps so v7x megacore gets both TCs.
    row_align = 16 if jnp.dtype(compute_dtype) == jnp.dtype(jnp.bfloat16) else 8
    batch_r = _round_up(batch, row_align)
    n_tiles = max(2, pl.cdiv(batch_r, int(block_rows)))
    tb = _round_up(pl.cdiv(batch_r, n_tiles), row_align)
    grid_n = pl.cdiv(batch_r, tb)
    padded_batch = tb * grid_n

    # x in compute dtype (halves read DMA on bf16 path); pad batch rows.
    x_p = x.astype(compute_dtype)
    if padded_batch != batch:
        x_p = jnp.pad(x_p, ((0, padded_batch - batch), (0, 0)))

    # Output written in compute dtype with a narrow (8-lane) slab -> minimal
    # HBM writeback; sliced / cast back to f32 below.
    out_dtype = compute_dtype

    in_specs = [pl.BlockSpec((tb, in_dim), lambda i: (i, 0))]
    flat_args = [x_p]
    for w, b in prepared_params:
        in_specs.append(pl.BlockSpec(w.shape, lambda i: (0, 0)))  # resident
        in_specs.append(pl.BlockSpec(b.shape, lambda i: (0, 0)))  # resident
        flat_args.extend([w, b])

    out_specs = pl.BlockSpec((tb, out_pad), lambda i: (i, 0))
    out_shape = jax.ShapeDtypeStruct((padded_batch, out_pad), out_dtype)

    # --- Cost estimate so XLA schedules/overlaps the custom call sensibly. ---
    flops = 2 * padded_batch * sum(
        w.shape[0] * w.shape[1] for w, _ in prepared_params)
    transcendentals = padded_batch * sum(
        w.shape[1] for w, _ in prepared_params[:-1])
    bytes_accessed = (
        x_p.size * x_p.dtype.itemsize
        + padded_batch * out_pad * jnp.dtype(out_dtype).itemsize
        + sum(w.size * w.dtype.itemsize + b.size * b.dtype.itemsize
              for w, b in prepared_params)
    )

    out_padded = pl.pallas_call(
        functools.partial(mlp_kernel, act_dtype=act_dtype),
        out_shape=out_shape,
        grid_spec=pltpu.PrefetchScalarGridSpec(
            num_scalar_prefetch=0,
            grid=(grid_n,),
            in_specs=in_specs,
            out_specs=out_specs,
        ),
        compiler_params=pltpu.CompilerParams(
            dimension_semantics=("parallel",),   # megacore sharding on v7x
            vmem_limit_bytes=32 * 1024 * 1024,   # safe on 64 MiB v7x VMEM
        ),
        cost_estimate=pl.CostEstimate(
            flops=flops,
            transcendentals=transcendentals,
            bytes_accessed=bytes_accessed,
        ),
    )(*flat_args)

    return out_padded[:batch, :out_dim].astype(jnp.float32)


def init_linear_params(key, in_features, out_features):
    """Deterministic init mimicking nn.Linear default (U[-k,k], k=1/sqrt(fan_in))."""
    k = 1.0 / jnp.sqrt(jnp.float32(in_features))
    kw, kb = jax.random.split(key)
    w = jax.random.uniform(kw, (in_features, out_features), jnp.float32, -k, k)
    b = jax.random.uniform(kb, (1, out_features), jnp.float32, -k, k)
    return w, b


def reference_forward(x, params, compute_dtype=jnp.float32,
                      act_dtype=jnp.float32):
    """Pure-JAX reference with the same dtype policy as the kernel."""
    h = x.astype(compute_dtype)
    n = len(params)
    for i, (w, b) in enumerate(params):
        a = jnp.dot(h.astype(compute_dtype), w.astype(compute_dtype),
                    preferred_element_type=jnp.float32)
        a = a + b.reshape(1, -1).astype(jnp.float32)
        if i < n - 1:
            h = jnp.tanh(a.astype(act_dtype))
        else:
            h = a
    return h


if __name__ == "__main__":
    # Small shapes consistent with the module: batch=8, in_dim=16, hidden=32, out_dim=4.
    batch, in_dim, hidden, out_dim = 8, 16, 32, 4

    root = jax.random.PRNGKey(0)
    kx, k1, k2, k3, k4, kx2 = jax.random.split(root, 6)

    x = jax.random.normal(kx, (batch, in_dim), jnp.float32)
    params = (
        init_linear_params(k1, in_dim, hidden),
        init_linear_params(k2, hidden, hidden * 2),
        init_linear_params(k3, hidden * 2, hidden),
        init_linear_params(k4, hidden, out_dim),
    )

    # 1) f32 path: tight-tolerance correctness check.
    params_f32 = prepare_params(params, compute_dtype=jnp.float32)
    fwd_f32 = jax.jit(functools.partial(
        network_forward, out_dim=out_dim, act_dtype=jnp.float32))
    out_f32 = jax.block_until_ready(fwd_f32(x, params_f32))
    ref_f32 = reference_forward(x, params, compute_dtype=jnp.float32,
                                act_dtype=jnp.float32)
    assert out_f32.shape == (batch, out_dim)
    assert jnp.allclose(out_f32, ref_f32, atol=1e-5, rtol=1e-5), (
        jnp.max(jnp.abs(out_f32 - ref_f32)))

    # 2) bf16 path (production config): compare against a reference using the
    #    same dtype policy (bf16 matmul inputs, act_dtype tanh, f32 accum).
    act_bf16 = default_act_dtype(jnp.bfloat16)
    params_bf16 = prepare_params(params, compute_dtype=jnp.bfloat16)
    fwd_bf16 = jax.jit(functools.partial(
        network_forward, out_dim=out_dim, act_dtype=act_bf16))
    out_bf16 = jax.block_until_ready(fwd_bf16(x, params_bf16))
    ref_bf16 = reference_forward(x, params, compute_dtype=jnp.bfloat16,
                                 act_dtype=act_bf16)
    assert out_bf16.shape == (batch, out_dim)
    assert jnp.allclose(out_bf16, ref_bf16, atol=2e-2, rtol=2e-2), (
        jnp.max(jnp.abs(out_bf16 - ref_bf16)))

    # 3) Large, non-tile-aligned batch: exercises the batch grid (>= 2 steps
    #    for megacore), resident weights and last-tile padding.
    big_batch = 1000
    x_big = jax.random.normal(kx2, (big_batch, in_dim), jnp.float32)
    out_big = jax.block_until_ready(fwd_bf16(x_big, params_bf16))
    ref_big = reference_forward(x_big, params, compute_dtype=jnp.bfloat16,
                                act_dtype=act_bf16)
    assert out_big.shape == (big_batch, out_dim)
    assert jnp.allclose(out_big, ref_big, atol=2e-2, rtol=2e-2), (
        jnp.max(jnp.abs(out_big - ref_big)))

    print("KERNEL_OK")
</pallas_src>

<mosaic_0001>
module attributes {stable_mosaic.version = 11 : i64} {
  func.func @mlp_kernel(%arg0: i32, %arg1: memref<8x16xf32, #tpu.memory_space<vmem>>, %arg2: memref<16x32xf32, #tpu.memory_space<vmem>>, %arg3: memref<1x32xf32, #tpu.memory_space<vmem>>, %arg4: memref<32x64xf32, #tpu.memory_space<vmem>>, %arg5: memref<1x64xf32, #tpu.memory_space<vmem>>, %arg6: memref<64x32xf32, #tpu.memory_space<vmem>>, %arg7: memref<1x32xf32, #tpu.memory_space<vmem>>, %arg8: memref<32x8xf32, #tpu.memory_space<vmem>>, %arg9: memref<1x8xf32, #tpu.memory_space<vmem>>, %arg10: memref<8x8xf32, #tpu.memory_space<vmem>>) attributes {dimension_semantics = [#tpu.dimension_semantics<parallel>], iteration_bounds = array<i64: 1>, scalar_prefetch = 0 : i64, scratch_operands = 0 : i64, tpu.core_type = #tpu.core_type<tc>, window_params = [{transform_indices = @transform_0, window_bounds = array<i64: 8, 16>}, {pipeline_mode = #tpu.pipeline_mode<synchronous>, transform_indices = @transform_1, window_bounds = array<i64: 16, 32>}, {pipeline_mode = #tpu.pipeline_mode<synchronous>, transform_indices = @transform_2, window_bounds = array<i64: 1, 32>}, {pipeline_mode = #tpu.pipeline_mode<synchronous>, transform_indices = @transform_3, window_bounds = array<i64: 32, 64>}, {pipeline_mode = #tpu.pipeline_mode<synchronous>, transform_indices = @transform_4, window_bounds = array<i64: 1, 64>}, {pipeline_mode = #tpu.pipeline_mode<synchronous>, transform_indices = @transform_5, window_bounds = array<i64: 64, 32>}, {pipeline_mode = #tpu.pipeline_mode<synchronous>, transform_indices = @transform_6, window_bounds = array<i64: 1, 32>}, {pipeline_mode = #tpu.pipeline_mode<synchronous>, transform_indices = @transform_7, window_bounds = array<i64: 32, 8>}, {pipeline_mode = #tpu.pipeline_mode<synchronous>, transform_indices = @transform_8, window_bounds = array<i64: 1, 8>}, {transform_indices = @transform_9, window_bounds = array<i64: 8, 8>}]} {
    %c0 = arith.constant 0 : index
    %c0_0 = arith.constant 0 : index
    %0 = vector.load %arg1[%c0, %c0_0] : memref<8x16xf32, #tpu.memory_space<vmem>>, vector<8x16xf32>
    %c0_1 = arith.constant 0 : index
    %c0_2 = arith.constant 0 : index
    %1 = vector.load %arg2[%c0_1, %c0_2] : memref<16x32xf32, #tpu.memory_space<vmem>>, vector<16x32xf32>
    %cst = arith.constant dense<0.000000e+00> : vector<8x32xf32>
    %2 = tpu.matmul %0, %1, %cst {dimension_numbers = #tpu.dot_dimension_numbers<[1], [0], [0], [1], [0, 0, 1, 1], [], []>} : vector<8x16xf32>, vector<16x32xf32>, vector<8x32xf32> -> vector<8x32xf32>
    %c0_3 = arith.constant 0 : index
    %c0_4 = arith.constant 0 : index
    %3 = vector.load %arg3[%c0_3, %c0_4] : memref<1x32xf32, #tpu.memory_space<vmem>>, vector<1x32xf32>
    %4 = vector.broadcast %3 : vector<1x32xf32> to vector<8x32xf32>
    %5 = arith.addf %2, %4 : vector<8x32xf32>
    %6 = math.tanh %5 : vector<8x32xf32>
    %c0_5 = arith.constant 0 : index
    %c0_6 = arith.constant 0 : index
    %7 = vector.load %arg4[%c0_5, %c0_6] : memref<32x64xf32, #tpu.memory_space<vmem>>, vector<32x64xf32>
    %cst_7 = arith.constant dense<0.000000e+00> : vector<8x64xf32>
    %8 = tpu.matmul %6, %7, %cst_7 {dimension_numbers = #tpu.dot_dimension_numbers<[1], [0], [0], [1], [0, 0, 1, 1], [], []>} : vector<8x32xf32>, vector<32x64xf32>, vector<8x64xf32> -> vector<8x64xf32>
    %c0_8 = arith.constant 0 : index
    %c0_9 = arith.constant 0 : index
    %9 = vector.load %arg5[%c0_8, %c0_9] : memref<1x64xf32, #tpu.memory_space<vmem>>, vector<1x64xf32>
    %10 = vector.broadcast %9 : vector<1x64xf32> to vector<8x64xf32>
    %11 = arith.addf %8, %10 : vector<8x64xf32>
    %12 = math.tanh %11 : vector<8x64xf32>
    %c0_10 = arith.constant 0 : index
    %c0_11 = arith.constant 0 : index
    %13 = vector.load %arg6[%c0_10, %c0_11] : memref<64x32xf32, #tpu.memory_space<vmem>>, vector<64x32xf32>
    %cst_12 = arith.constant dense<0.000000e+00> : vector<8x32xf32>
    %14 = tpu.matmul %12, %13, %cst_12 {dimension_numbers = #tpu.dot_dimension_numbers<[1], [0], [0], [1], [0, 0, 1, 1], [], []>} : vector<8x64xf32>, vector<64x32xf32>, vector<8x32xf32> -> vector<8x32xf32>
    %c0_13 = arith.constant 0 : index
    %c0_14 = arith.constant 0 : index
    %15 = vector.load %arg7[%c0_13, %c0_14] : memref<1x32xf32, #tpu.memory_space<vmem>>, vector<1x32xf32>
    %16 = vector.broadcast %15 : vector<1x32xf32> to vector<8x32xf32>
    %17 = arith.addf %14, %16 : vector<8x32xf32>
    %18 = math.tanh %17 : vector<8x32xf32>
    %c0_15 = arith.constant 0 : index
    %c0_16 = arith.constant 0 : index
    %19 = vector.load %arg8[%c0_15, %c0_16] : memref<32x8xf32, #tpu.memory_space<vmem>>, vector<32x8xf32>
    %cst_17 = arith.constant dense<0.000000e+00> : vector<8x8xf32>
    %20 = tpu.matmul %18, %19, %cst_17 {dimension_numbers = #tpu.dot_dimension_numbers<[1], [0], [0], [1], [0, 0, 1, 1], [], []>} : vector<8x32xf32>, vector<32x8xf32>, vector<8x8xf32> -> vector<8x8xf32>
    %c0_18 = arith.constant 0 : index
    %c0_19 = arith.constant 0 : index
    %21 = vector.load %arg9[%c0_18, %c0_19] : memref<1x8xf32, #tpu.memory_space<vmem>>, vector<1x8xf32>
    %22 = vector.broadcast %21 : vector<1x8xf32> to vector<8x8xf32>
    %23 = arith.addf %20, %22 : vector<8x8xf32>
    %c0_20 = arith.constant 0 : index
    %c0_21 = arith.constant 0 : index
    %24 = vector.load %arg10[%c0_20, %c0_21] : memref<8x8xf32, #tpu.memory_space<vmem>>, vector<8x8xf32>
    tpu.vector_store %arg10[%c0_20, %c0_21], %23 {strides = array<i32>} : memref<8x8xf32, #tpu.memory_space<vmem>>, vector<8x8xf32>,
    return
  }
  func.func @transform_0(%arg0: i32) -> (i32, i32) {
    %c0_i32 = arith.constant 0 : i32
    %c0_i32_0 = arith.constant 0 : i32
    return %arg0, %c0_i32 : i32, i32
  }
  func.func @transform_1(%arg0: i32) -> (i32, i32) {
    %c0_i32 = arith.constant 0 : i32
    %c0_i32_0 = arith.constant 0 : i32
    %c0_i32_1 = arith.constant 0 : i32
    return %c0_i32, %c0_i32_0 : i32, i32
  }
  func.func @transform_2(%arg0: i32) -> (i32, i32) {
    %c0_i32 = arith.constant 0 : i32
    %c0_i32_0 = arith.constant 0 : i32
    %c0_i32_1 = arith.constant 0 : i32
    return %c0_i32, %c0_i32_0 : i32, i32
  }
  func.func @transform_3(%arg0: i32) -> (i32, i32) {
    %c0_i32 = arith.constant 0 : i32
    %c0_i32_0 = arith.constant 0 : i32
    %c0_i32_1 = arith.constant 0 : i32
    return %c0_i32, %c0_i32_0 : i32, i32
  }
  func.func @transform_4(%arg0: i32) -> (i32, i32) {
    %c0_i32 = arith.constant 0 : i32
    %c0_i32_0 = arith.constant 0 : i32
    %c0_i32_1 = arith.constant 0 : i32
    return %c0_i32, %c0_i32_0 : i32, i32
  }
  func.func @transform_5(%arg0: i32) -> (i32, i32) {
    %c0_i32 = arith.constant 0 : i32
    %c0_i32_0 = arith.constant 0 : i32
    %c0_i32_1 = arith.constant 0 : i32
    return %c0_i32, %c0_i32_0 : i32, i32
  }
  func.func @transform_6(%arg0: i32) -> (i32, i32) {
    %c0_i32 = arith.constant 0 : i32
    %c0_i32_0 = arith.constant 0 : i32
    %c0_i32_1 = arith.constant 0 : i32
    return %c0_i32, %c0_i32_0 : i32, i32
  }
  func.func @transform_7(%arg0: i32) -> (i32, i32) {
    %c0_i32 = arith.constant 0 : i32
    %c0_i32_0 = arith.constant 0 : i32
    %c0_i32_1 = arith.constant 0 : i32
    return %c0_i32, %c0_i32_0 : i32, i32
  }
  func.func @transform_8(%arg0: i32) -> (i32, i32) {
    %c0_i32 = arith.constant 0 : i32
    %c0_i32_0 = arith.constant 0 : i32
    %c0_i32_1 = arith.constant 0 : i32
    return %c0_i32, %c0_i32_0 : i32, i32
  }
  func.func @transform_9(%arg0: i32) -> (i32, i32) {
    %c0_i32 = arith.constant 0 : i32
    %c0_i32_0 = arith.constant 0 : i32
    return %arg0, %c0_i32 : i32, i32
  }
}

</mosaic_0001>

<llo_original>
// kernel: network_forward.1
$region0: #{network_forward.1}
  #allocation0 [shape = 'u32[]', space=smem, size = 0x4, offset = 0x4, fixed_abs, tag = 'smem constant byte address 0x4 - core index']
  #allocation1 [shape = 'u32[144,128]{1,0:T(1,128)}', space=vmem, size = 0x12000, scoped, tag = 'internal scratch']
  %s0 = inlined_call_operand.vmem [shape: f32[8,16], index: 0, kind: input, shape index: {}]
  %s1 = inlined_call_operand.vmem [shape: f32[16,32], index: 1, kind: input, shape index: {}]
  %s2 = inlined_call_operand.vmem [shape: f32[1,32], index: 2, kind: input, shape index: {}]
  %s3 = inlined_call_operand.vmem [shape: f32[32,64], index: 3, kind: input, shape index: {}]
  %s4 = inlined_call_operand.vmem [shape: f32[1,64], index: 4, kind: input, shape index: {}]
  %s5 = inlined_call_operand.vmem [shape: f32[64,32], index: 5, kind: input, shape index: {}]
  %s6 = inlined_call_operand.vmem [shape: f32[1,32], index: 6, kind: input, shape index: {}]
  %s7 = inlined_call_operand.vmem [shape: f32[32,8], index: 7, kind: input, shape index: {}]
  %s8 = inlined_call_operand.vmem [shape: f32[1,8], index: 8, kind: input, shape index: {}]
  %s9 = inlined_call_operand.vmem [shape: f32[8,8], index: 9, kind: output, shape index: {}]
  %s10 = sld [smem:[#allocation0]]
  $region46: #{network_forward.1} parent=0
    _
  %s12 = ssub.s32 1, %s10
  %s13 = scalar_select 0, %s12, %s10
  // Predicated region
  $region2: #{network_forward.1} parent=0 // pred_check
    _
  $region3: #{network_forward.1} parent=0 // pred_check_branch
    %15 = sbr.rel (0) target = $region5
  $region4: #{network_forward.1} parent=0 // pred_region
    _
  $region5: #{network_forward.1} parent=0 // pred_fallthru
    _
  // Predicated region
  $region6: #{network_forward.1} parent=0 // pred_check
    _
  $region7: #{network_forward.1} parent=0 // pred_check_branch
    %17 = sbr.rel (0) target = $region9
  $region8: #{network_forward.1} parent=0 // pred_region
    _
  $region9: #{network_forward.1} parent=0 // pred_fallthru
    _
  // Predicated region
  $region10: #{network_forward.1} parent=0 // pred_check
    _
  $region11: #{network_forward.1} parent=0 // pred_check_branch
    %19 = sbr.rel (0) target = $region13
  $region12: #{network_forward.1} parent=0 // pred_region
    _
  $region13: #{network_forward.1} parent=0 // pred_fallthru
    _
  // Predicated region
  $region14: #{network_forward.1} parent=0 // pred_check
    _
  $region15: #{network_forward.1} parent=0 // pred_check_branch
    %21 = sbr.rel (0) target = $region17
  $region16: #{network_forward.1} parent=0 // pred_region
    _
  $region17: #{network_forward.1} parent=0 // pred_fallthru
    _
  // Predicated region
  $region18: #{network_forward.1} parent=0 // pred_check
    _
  $region19: #{network_forward.1} parent=0 // pred_check_branch
    %23 = sbr.rel (0) target = $region21
  $region20: #{network_forward.1} parent=0 // pred_region
    _
  $region21: #{network_forward.1} parent=0 // pred_fallthru
    _
  // Predicated region
  $region22: #{network_forward.1} parent=0 // pred_check
    _
  $region23: #{network_forward.1} parent=0 // pred_check_branch
    %25 = sbr.rel (0) target = $region25
  $region24: #{network_forward.1} parent=0 // pred_region
    _
  $region25: #{network_forward.1} parent=0 // pred_fallthru
    _
  // Predicated region
  $region26: #{network_forward.1} parent=0 // pred_check
    _
  $region27: #{network_forward.1} parent=0 // pred_check_branch
    %27 = sbr.rel (0) target = $region29
  $region28: #{network_forward.1} parent=0 // pred_region
    _
  $region29: #{network_forward.1} parent=0 // pred_fallthru
    _
  // Predicated region
  $region30: #{network_forward.1} parent=0 // pred_check
    _
  $region31: #{network_forward.1} parent=0 // pred_check_branch
    %29 = sbr.rel (0) target = $region33
  $region32: #{network_forward.1} parent=0 // pred_region
    _
  $region33: #{network_forward.1} parent=0 // pred_fallthru
    _
  // Predicated region
  $region34: #{network_forward.1} parent=0 // pred_check
    _
  $region35: #{network_forward.1} parent=0 // pred_check_branch
    %31 = sbr.rel (0) target = $region37
  $region36: #{network_forward.1} parent=0 // pred_region
    _
  $region37: #{network_forward.1} parent=0 // pred_fallthru
    _
  %v32 = vld [vmem:[%s0] sm:$0xff]
  %v33 = vld [vmem:[%s1] sm:$0xff]
  %v34 = vld [vmem:[%s1 + $0x8] sm:$0xff]
  %v35 = vld [vmem:[%s2] sm:$0x1]
  %v37 = vlaneseq
  %v38 = vshrl.u32 %v37, 7
  %v39 = vsub.s32 0, %v38
  %v40 = vrot.slane %v35, %v39
  %vm42 = vcmask 130048
  %v44 = vsel %vm42, %v32, 0
  %46 = vmatprep.subr.mxu0 0.0
  %47 = vmatpush1.msra.mxu0 0.0
  %48 = vmatprep.subr.mxu0 0.0
  %49 = vmatpush1.msra.mxu0 0.0
  %50 = vmatprep.subr.mxu0 0.0
  %51 = vmatpush1.msra.mxu0 0.0
  %52 = vmatprep.subr.mxu0 0.0
  %53 = vmatpush1.msra.mxu0 0.0
  %54 = vmatprep.subr.mxu0 0.0
  %55 = vmatpush1.msra.mxu0 0.0
  %56 = vmatprep.subr.mxu0 0.0
  %57 = vmatpush1.msra.mxu0 0.0
  %58 = vmatprep.subr.mxu0 0.0
  %59 = vmatpush1.msra.mxu0 0.0
  %60 = vmatprep.subr.mxu0 0.0
  %61 = vmatpush1.msra.mxu0 0.0
  %62 = vmatprep.subr.mxu0 0.0
  %63 = vmatpush1.msra.mxu0 0.0
  %64 = vmatprep.subr.mxu0 0.0
  %65 = vmatpush1.msra.mxu0 0.0
  %66 = vmatprep.subr.mxu0 0.0
  %67 = vmatpush1.msra.mxu0 0.0
  %68 = vmatprep.subr.mxu0 0.0
  %69 = vmatpush1.msra.mxu0 0.0
  %70 = vmatprep.subr.mxu0 0.0
  %71 = vmatpush1.msra.mxu0 0.0
  %72 = vmatprep.subr.mxu0 0.0
  %73 = vmatpush1.msra.mxu0 0.0
  %74 = vmatprep.subr.mxu0 0.0
  %75 = vmatpush1.msra.mxu0 %v34
  %76 = vmatprep.subr.mxu0 0.0
  %77 = vmatpush1.msra.mxu0 %v33
  %78 = vmatprep.subr.mxu0 0.0
  %79 = vmatpush2.msra.mxu0 0.0
  %80 = vmatprep.subr.mxu0 0.0
  %81 = vmatpush2.msra.mxu0 0.0
  %82 = vmatprep.subr.mxu0 0.0
  %83 = vmatpush2.msra.mxu0 0.0
  %84 = vmatprep.subr.mxu0 0.0
  %85 = vmatpush2.msra.mxu0 0.0
  %86 = vmatprep.subr.mxu0 0.0
  %87 = vmatpush2.msra.mxu0 0.0
  %88 = vmatprep.subr.mxu0 0.0
  %89 = vmatpush2.msra.mxu0 0.0
  %90 = vmatprep.subr.mxu0 0.0
  %91 = vmatpush2.msra.mxu0 0.0
  %92 = vmatprep.subr.mxu0 0.0
  %93 = vmatpush2.msra.mxu0 0.0
  %94 = vmatprep.subr.mxu0 0.0
  %95 = vmatpush2.msra.mxu0 0.0
  %96 = vmatprep.subr.mxu0 0.0
  %97 = vmatpush2.msra.mxu0 0.0
  %98 = vmatprep.subr.mxu0 0.0
  %99 = vmatpush2.msra.mxu0 0.0
  %100 = vmatprep.subr.mxu0 0.0
  %101 = vmatpush2.msra.mxu0 0.0
  %102 = vmatprep.subr.mxu0 0.0
  %103 = vmatpush2.msra.mxu0 0.0
  %104 = vmatprep.subr.mxu0 0.0
  %105 = vmatpush2.msra.mxu0 0.0
  %106 = vmatprep.subr.mxu0 0.0
  %107 = vmatpush2.msra.mxu0 0.0
  %108 = vmatprep.subr.mxu0 0.0
  %109 = vmatpush2.msra.mxu0 0.0
  %110 = vmatprep.mubr.f32.mxu0 0.0
  %111 = vmatmul.mubr.f32.gmra.mxu0 %v44
  %v112 = vpop.f32.mrf.mxu0
  %v113 = vadd.f32 %v40, %v112
  %v114 = vpop.f32.mrf.mxu0
  %115 = vdwg.mxu0
  %v116 = vtanh.pop %v113
  %v117 = vld [vmem:[%s3] sm:$0xff]
  %v118 = vld [vmem:[%s3 + $0x8] sm:$0xff]
  %v119 = vld [vmem:[%s3 + $0x10] sm:$0xff]
  %v120 = vld [vmem:[%s3 + $0x18] sm:$0xff]
  %v121 = vld [vmem:[%s4] sm:$0x1]
  %v123 = vlaneseq
  %v124 = vshrl.u32 %v123, 7
  %v125 = vsub.s32 0, %v124
  %v126 = vrot.slane %v121, %v125
  %vm128 = vcmask 261120
  %v130 = vsel %vm128, %v116, 0
  %132 = vmatprep.subr.mxu0 0.0
  %133 = vmatpush1.msra.mxu0 0.0
  %134 = vmatprep.subr.mxu0 0.0
  %135 = vmatpush1.msra.mxu0 0.0
  %136 = vmatprep.subr.mxu0 0.0
  %137 = vmatpush1.msra.mxu0 0.0
  %138 = vmatprep.subr.mxu0 0.0
  %139 = vmatpush1.msra.mxu0 0.0
  %140 = vmatprep.subr.mxu0 0.0
  %141 = vmatpush1.msra.mxu0 0.0
  %142 = vmatprep.subr.mxu0 0.0
  %143 = vmatpush1.msra.mxu0 0.0
  %144 = vmatprep.subr.mxu0 0.0
  %145 = vmatpush1.msra.mxu0 0.0
  %146 = vmatprep.subr.mxu0 0.0
  %147 = vmatpush1.msra.mxu0 0.0
  %148 = vmatprep.subr.mxu0 0.0
  %149 = vmatpush1.msra.mxu0 0.0
  %150 = vmatprep.subr.mxu0 0.0
  %151 = vmatpush1.msra.mxu0 0.0
  %152 = vmatprep.subr.mxu0 0.0
  %153 = vmatpush1.msra.mxu0 0.0
  %154 = vmatprep.subr.mxu0 0.0
  %155 = vmatpush1.msra.mxu0 0.0
  %156 = vmatprep.subr.mxu0 0.0
  %157 = vmatpush1.msra.mxu0 %v120
  %158 = vmatprep.subr.mxu0 0.0
  %159 = vmatpush1.msra.mxu0 %v119
  %160 = vmatprep.subr.mxu0 0.0
  %161 = vmatpush1.msra.mxu0 %v118
  %162 = vmatprep.subr.mxu0 0.0
  %163 = vmatpush1.msra.mxu0 %v117
  %164 = vmatprep.subr.mxu0 0.0
  %165 = vmatpush2.msra.mxu0 0.0
  %166 = vmatprep.subr.mxu0 0.0
  %167 = vmatpush2.msra.mxu0 0.0
  %168 = vmatprep.subr.mxu0 0.0
  %169 = vmatpush2.msra.mxu0 0.0
  %170 = vmatprep.subr.mxu0 0.0
  %171 = vmatpush2.msra.mxu0 0.0
  %172 = vmatprep.subr.mxu0 0.0
  %173 = vmatpush2.msra.mxu0 0.0
  %174 = vmatprep.subr.mxu0 0.0
  %175 = vmatpush2.msra.mxu0 0.0
  %176 = vmatprep.subr.mxu0 0.0
  %177 = vmatpush2.msra.mxu0 0.0
  %178 = vmatprep.subr.mxu0 0.0
  %179 = vmatpush2.msra.mxu0 0.0
  %180 = vmatprep.subr.mxu0 0.0
  %181 = vmatpush2.msra.mxu0 0.0
  %182 = vmatprep.subr.mxu0 0.0
  %183 = vmatpush2.msra.mxu0 0.0
  %184 = vmatprep.subr.mxu0 0.0
  %185 = vmatpush2.msra.mxu0 0.0
  %186 = vmatprep.subr.mxu0 0.0
  %187 = vmatpush2.msra.mxu0 0.0
  %188 = vmatprep.subr.mxu0 0.0
  %189 = vmatpush2.msra.mxu0 0.0
  %190 = vmatprep.subr.mxu0 0.0
  %191 = vmatpush2.msra.mxu0 0.0
  %192 = vmatprep.subr.mxu0 0.0
  %193 = vmatpush2.msra.mxu0 0.0
  %194 = vmatprep.subr.mxu0 0.0
  %195 = vmatpush2.msra.mxu0 0.0
  %196 = vmatprep.mubr.f32.mxu0 0.0
  %197 = vmatmul.mubr.f32.gmra.mxu0 %v130
  %v198 = vpop.f32.mrf.mxu0
  %v199 = vadd.f32 %v126, %v198
  %v200 = vpop.f32.mrf.mxu0
  %201 = vdwg.mxu0
  %v202 = vtanh.pop %v199
  %v203 = vld [vmem:[%s5] sm:$0xff]
  %v204 = vld [vmem:[%s5 + $0x8] sm:$0xff]
  %v205 = vld [vmem:[%s5 + $0x10] sm:$0xff]
  %v206 = vld [vmem:[%s5 + $0x18] sm:$0xff]
  %v207 = vld [vmem:[%s5 + $0x20] sm:$0xff]
  %v208 = vld [vmem:[%s5 + $0x28] sm:$0xff]
  %v209 = vld [vmem:[%s5 + $0x30] sm:$0xff]
  %v210 = vld [vmem:[%s5 + $0x38] sm:$0xff]
  %v211 = vld [vmem:[%s6] sm:$0x1]
  %v213 = vlaneseq
  %v214 = vshrl.u32 %v213, 7
  %v215 = vsub.s32 0, %v214
  %v216 = vrot.slane %v211, %v215
  %vm218 = vcmask 523264
  %v220 = vsel %vm218, %v202, 0
  %222 = vmatprep.subr.mxu0 0.0
  %223 = vmatpush1.msra.mxu0 0.0
  %224 = vmatprep.subr.mxu0 0.0
  %225 = vmatpush1.msra.mxu0 0.0
  %226 = vmatprep.subr.mxu0 0.0
  %227 = vmatpush1.msra.mxu0 0.0
  %228 = vmatprep.subr.mxu0 0.0
  %229 = vmatpush1.msra.mxu0 0.0
  %230 = vmatprep.subr.mxu0 0.0
  %231 = vmatpush1.msra.mxu0 0.0
  %232 = vmatprep.subr.mxu0 0.0
  %233 = vmatpush1.msra.mxu0 0.0
  %234 = vmatprep.subr.mxu0 0.0
  %235 = vmatpush1.msra.mxu0 0.0
  %236 = vmatprep.subr.mxu0 0.0
  %237 = vmatpush1.msra.mxu0 0.0
  %238 = vmatprep.subr.mxu0 0.0
  %239 = vmatpush1.msra.mxu0 %v210
  %240 = vmatprep.subr.mxu0 0.0
  %241 = vmatpush1.msra.mxu0 %v209
  %242 = vmatprep.subr.mxu0 0.0
  %243 = vmatpush1.msra.mxu0 %v208
  %244 = vmatprep.subr.mxu0 0.0
  %245 = vmatpush1.msra.mxu0 %v207
  %246 = vmatprep.subr.mxu0 0.0
  %247 = vmatpush1.msra.mxu0 %v206
  %248 = vmatprep.subr.mxu0 0.0
  %249 = vmatpush1.msra.mxu0 %v205
  %250 = vmatprep.subr.mxu0 0.0
  %251 = vmatpush1.msra.mxu0 %v204
  %252 = vmatprep.subr.mxu0 0.0
  %253 = vmatpush1.msra.mxu0 %v203
  %254 = vmatprep.subr.mxu0 0.0
  %255 = vmatpush2.msra.mxu0 0.0
  %256 = vmatprep.subr.mxu0 0.0
  %257 = vmatpush2.msra.mxu0 0.0
  %258 = vmatprep.subr.mxu0 0.0
  %259 = vmatpush2.msra.mxu0 0.0
  %260 = vmatprep.subr.mxu0 0.0
  %261 = vmatpush2.msra.mxu0 0.0
  %262 = vmatprep.subr.mxu0 0.0
  %263 = vmatpush2.msra.mxu0 0.0
  %264 = vmatprep.subr.mxu0 0.0
  %265 = vmatpush2.msra.mxu0 0.0
  %266 = vmatprep.subr.mxu0 0.0
  %267 = vmatpush2.msra.mxu0 0.0
  %268 = vmatprep.subr.mxu0 0.0
  %269 = vmatpush2.msra.mxu0 0.0
  %270 = vmatprep.subr.mxu0 0.0
  %271 = vmatpush2.msra.mxu0 0.0
  %272 = vmatprep.subr.mxu0 0.0
  %273 = vmatpush2.msra.mxu0 0.0
  %274 = vmatprep.subr.mxu0 0.0
  %275 = vmatpush2.msra.mxu0 0.0
  %276 = vmatprep.subr.mxu0 0.0
  %277 = vmatpush2.msra.mxu0 0.0
  %278 = vmatprep.subr.mxu0 0.0
  %279 = vmatpush2.msra.mxu0 0.0
  %280 = vmatprep.subr.mxu0 0.0
  %281 = vmatpush2.msra.mxu0 0.0
  %282 = vmatprep.subr.mxu0 0.0
  %283 = vmatpush2.msra.mxu0 0.0
  %284 = vmatprep.subr.mxu0 0.0
  %285 = vmatpush2.msra.mxu0 0.0
  %286 = vmatprep.mubr.f32.mxu0 0.0
  %287 = vmatmul.mubr.f32.gmra.mxu0 %v220
  %v288 = vpop.f32.mrf.mxu0
  %v289 = vadd.f32 %v216, %v288
  %v290 = vpop.f32.mrf.mxu0
  %291 = vdwg.mxu0
  %v292 = vtanh.pop %v289
  %v293 = vld [vmem:[%s7] sm:$0xff]
  %v294 = vld [vmem:[%s7 + $0x8] sm:$0xff]
  %v295 = vld [vmem:[%s7 + $0x10] sm:$0xff]
  %v296 = vld [vmem:[%s7 + $0x18] sm:$0xff]
  %v297 = vld [vmem:[%s8] sm:$0x1]
  %v299 = vlaneseq
  %v300 = vshrl.u32 %v299, 7
  %v301 = vsub.s32 0, %v300
  %v302 = vrot.slane %v297, %v301
  %v305 = vsel %vm128, %v292, 0
  %307 = vmatprep.subr.mxu0 0.0
  %308 = vmatpush1.msra.mxu0 0.0
  %309 = vmatprep.subr.mxu0 0.0
  %310 = vmatpush1.msra.mxu0 0.0
  %311 = vmatprep.subr.mxu0 0.0
  %312 = vmatpush1.msra.mxu0 0.0
  %313 = vmatprep.subr.mxu0 0.0
  %314 = vmatpush1.msra.mxu0 0.0
  %315 = vmatprep.subr.mxu0 0.0
  %316 = vmatpush1.msra.mxu0 0.0
  %317 = vmatprep.subr.mxu0 0.0
  %318 = vmatpush1.msra.mxu0 0.0
  %319 = vmatprep.subr.mxu0 0.0
  %320 = vmatpush1.msra.mxu0 0.0
  %321 = vmatprep.subr.mxu0 0.0
  %322 = vmatpush1.msra.mxu0 0.0
  %323 = vmatprep.subr.mxu0 0.0
  %324 = vmatpush1.msra.mxu0 0.0
  %325 = vmatprep.subr.mxu0 0.0
  %326 = vmatpush1.msra.mxu0 0.0
  %327 = vmatprep.subr.mxu0 0.0
  %328 = vmatpush1.msra.mxu0 0.0
  %329 = vmatprep.subr.mxu0 0.0
  %330 = vmatpush1.msra.mxu0 0.0
  %331 = vmatprep.subr.mxu0 0.0
  %332 = vmatpush1.msra.mxu0 %v296
  %333 = vmatprep.subr.mxu0 0.0
  %334 = vmatpush1.msra.mxu0 %v295
  %335 = vmatprep.subr.mxu0 0.0
  %336 = vmatpush1.msra.mxu0 %v294
  %337 = vmatprep.subr.mxu0 0.0
  %338 = vmatpush1.msra.mxu0 %v293
  %339 = vmatprep.subr.mxu0 0.0
  %340 = vmatpush2.msra.mxu0 0.0
  %341 = vmatprep.subr.mxu0 0.0
  %342 = vmatpush2.msra.mxu0 0.0
  %343 = vmatprep.subr.mxu0 0.0
  %344 = vmatpush2.msra.mxu0 0.0
  %345 = vmatprep.subr.mxu0 0.0
  %346 = vmatpush2.msra.mxu0 0.0
  %347 = vmatprep.subr.mxu0 0.0
  %348 = vmatpush2.msra.mxu0 0.0
  %349 = vmatprep.subr.mxu0 0.0
  %350 = vmatpush2.msra.mxu0 0.0
  %351 = vmatprep.subr.mxu0 0.0
  %352 = vmatpush2.msra.mxu0 0.0
  %353 = vmatprep.subr.mxu0 0.0
  %354 = vmatpush2.msra.mxu0 0.0
  %355 = vmatprep.subr.mxu0 0.0
  %356 = vmatpush2.msra.mxu0 0.0
  %357 = vmatprep.subr.mxu0 0.0
  %358 = vmatpush2.msra.mxu0 0.0
  %359 = vmatprep.subr.mxu0 0.0
  %360 = vmatpush2.msra.mxu0 0.0
  %361 = vmatprep.subr.mxu0 0.0
  %362 = vmatpush2.msra.mxu0 0.0
  %363 = vmatprep.subr.mxu0 0.0
  %364 = vmatpush2.msra.mxu0 0.0
  %365 = vmatprep.subr.mxu0 0.0
  %366 = vmatpush2.msra.mxu0 0.0
  %367 = vmatprep.subr.mxu0 0.0
  %368 = vmatpush2.msra.mxu0 0.0
  %369 = vmatprep.subr.mxu0 0.0
  %370 = vmatpush2.msra.mxu0 0.0
  %371 = vmatprep.mubr.f32.mxu0 0.0
  %372 = vmatmul.mubr.f32.gmra.mxu0 %v305
  %v373 = vpop.f32.mrf.mxu0
  %v374 = vadd.f32 %v302, %v373
  %v375 = vpop.f32.mrf.mxu0
  %376 = vdwg.mxu0
  %vm377 = vcmask 64512
  %378 = vst.msk [vmem:[%s9] sm:$0xff] %vm377, %v374
  // Predicated region
  $region38: #{network_forward.1} parent=0 // pred_check
    _
  $region39: #{network_forward.1} parent=0 // pred_check_branch
    %380 = sbr.rel (0) target = $region41
  $region40: #{network_forward.1} parent=0 // pred_region
    _
  $region41: #{network_forward.1} parent=0 // pred_fallthru
    _
  // Predicated region
  $region42: #{network_forward.1} parent=0 // pred_check
    _
  $region43: #{network_forward.1} parent=0 // pred_check_branch
    %382 = sbr.rel (0) target = $region45
  $region44: #{network_forward.1} parent=0 // pred_region
    _
  $region45: #{network_forward.1} parent=0 // pred_fallthru
    _

</llo_original>
